<compile_context>
chip_gen: v7x
topology: tpu7x:2x2x1
jax: 0.10.0
libtpu: 0.0.40
codegen_flags: <defaults>
</compile_context>

<pallas_src>
import functools

import jax
import jax.numpy as jnp
from jax import lax
from jax.experimental import pallas as pl
from jax.experimental.pallas import tpu as pltpu

_LANES = 128
_SUBLANES = 8


def _dice_sums_kernel(x_ref, y_ref, i_ref, u_ref, *,
                      rows_total, rows_per_step, need_mask):
    k = pl.program_id(1)

    # Output blocks are resident across the inner ("arbitrary") reduction axis
    # -> accumulator pattern: init at step 0, accumulate every step.
    @pl.when(k == 0)
    def _():
        i_ref[...] = jnp.zeros_like(i_ref)
        u_ref[...] = jnp.zeros_like(u_ref)

    x = x_ref[0].astype(jnp.float32)      # (S, 128), cast in-register
    y = y_ref[0].astype(jnp.float32)      # (S, 128)
    s = jax.nn.sigmoid(x)

    prod = s * y
    plus = s + y

    if need_mask:
        # Last feature block may extend past the true number of rows; zero out
        # the out-of-bounds rows (jnp.where also neutralizes any OOB garbage).
        valid = rows_total - k * rows_per_step
        row_ids = lax.broadcasted_iota(jnp.int32, (rows_per_step, _LANES), 0)
        mask = row_ids < valid
        prod = jnp.where(mask, prod, 0.0)
        plus = jnp.where(mask, plus, 0.0)

    # Fold S rows down to an (8, 128) partial using only cross-vreg VPU adds
    # (no per-step XLU lane reduce); the reshape does not cross (8,128) tiles.
    n_groups = rows_per_step // _SUBLANES
    i_part = prod.reshape(n_groups, _SUBLANES, _LANES).sum(axis=0)
    u_part = plus.reshape(n_groups, _SUBLANES, _LANES).sum(axis=0)

    i_ref[...] += i_part[None, :, :]
    u_ref[...] += u_part[None, :, :]


def _dice_sums(x3, y3, *, max_rows_per_step):
    """Per-batch partial sums of sigmoid(x)*y and sigmoid(x)+y.

    x3, y3: (B, R, 128) with R a multiple of 8.  Returns two (B, 8, 128)
    float32 arrays of per-lane/per-sublane partial sums.
    """
    B, R, _ = x3.shape
    S = min(R, max_rows_per_step)          # both multiples of 8 -> S % 8 == 0
    nk = pl.cdiv(R, S)
    need_mask = (nk * S != R)

    kernel = functools.partial(_dice_sums_kernel, rows_total=R,
                               rows_per_step=S, need_mask=need_mask)

    i_acc, u_acc = pl.pallas_call(
        kernel,
        out_shape=(jax.ShapeDtypeStruct((B, _SUBLANES, _LANES), jnp.float32),
                   jax.ShapeDtypeStruct((B, _SUBLANES, _LANES), jnp.float32)),
        grid_spec=pltpu.PrefetchScalarGridSpec(
            num_scalar_prefetch=0,
            grid=(B, nk),
            in_specs=[pl.BlockSpec((1, S, _LANES), lambda b, k: (b, k, 0)),
                      pl.BlockSpec((1, S, _LANES), lambda b, k: (b, k, 0))],
            out_specs=(pl.BlockSpec((1, _SUBLANES, _LANES),
                                    lambda b, k: (b, 0, 0)),
                       pl.BlockSpec((1, _SUBLANES, _LANES),
                                    lambda b, k: (b, 0, 0))),
        ),
        compiler_params=pltpu.CompilerParams(
            dimension_semantics=("parallel", "arbitrary")),
    )(x3, y3)
    return i_acc, u_acc


@functools.partial(jax.jit, static_argnames=("image", "max_rows_per_step"))
def dice_loss(x, y, *, image=False, max_rows_per_step=2048):
    """Pallas implementation of DiceLoss.forward(x, y)."""
    B = x.shape[0]
    xf = x.reshape(B, -1)                  # contiguous flatten, no copy
    yf = y.reshape(B, -1)
    F = xf.shape[1]

    blk = _SUBLANES * _LANES               # 1024
    Fp = ((F + blk - 1) // blk) * blk
    if Fp != F:
        # Fallback (one extra HBM pass) only when C*H*W % 1024 != 0.
        # Pad x with a large negative (sigmoid -> 0) and y with 0 so the pad
        # contributes exactly 0 to both sums.
        # TODO(synk): mask the lane/sublane tail in-kernel to avoid the pad copy.
        xf = jnp.pad(xf, ((0, 0), (0, Fp - F)), constant_values=-1e9)
        yf = jnp.pad(yf, ((0, 0), (0, Fp - F)))

    R = Fp // _LANES                       # multiple of 8
    x3 = xf.reshape(B, R, _LANES)
    y3 = yf.reshape(B, R, _LANES)

    i_acc, u_acc = _dice_sums(x3, y3, max_rows_per_step=max_rows_per_step)
    i = jnp.sum(i_acc, axis=(1, 2))        # (B,)  final lane/sublane reduce
    u = jnp.sum(u_acc, axis=(1, 2))        # (B,)

    if image:
        dc = (2.0 * i + 1.0) / (u + 1.0)                      # per-image dice
    else:
        dc = (2.0 * jnp.sum(i) + 1.0) / (jnp.sum(u) + 1.0)    # global dice
    return 1.0 - jnp.mean(dc)


def _dice_loss_ref(x, y, image=False):
    """Pure-JAX reference mirroring the PyTorch module."""
    s = jax.nn.sigmoid(x.astype(jnp.float32))
    yf = y.astype(jnp.float32)
    if image:
        i = (s * yf).reshape(x.shape[0], -1).sum(1)
        u = (s + yf).reshape(x.shape[0], -1).sum(1)
    else:
        i = (s * yf).sum()
        u = (s + yf).sum()
    dc = (2.0 * i + 1.0) / (u + 1.0)
    return 1.0 - jnp.mean(dc)


if __name__ == "__main__":
    key = jax.random.PRNGKey(0)
    kx, ky = jax.random.split(key)

    # Small segmentation-style shapes: NCHW logits + binary mask.
    x = jax.random.normal(kx, (2, 4, 16, 16), dtype=jnp.float32)
    y = (jax.random.uniform(ky, (2, 4, 16, 16)) > 0.5).astype(jnp.float32)

    # Default mode (image=False), like DiceLoss().
    out = jax.block_until_ready(dice_loss(x, y, image=False))
    ref = jax.block_until_ready(_dice_loss_ref(x, y, image=False))
    assert jnp.allclose(out, ref, atol=1e-5), (out, ref)

    # image=True mode, like DiceLoss(image=True).
    out_img = jax.block_until_ready(dice_loss(x, y, image=True))
    ref_img = jax.block_until_ready(_dice_loss_ref(x, y, image=True))
    assert jnp.allclose(out_img, ref_img, atol=1e-5), (out_img, ref_img)

    # bf16 inputs go straight into the kernel (no wrapper f32 cast / no extra
    # HBM pass); compute stays f32 in-kernel.
    xb = x.astype(jnp.bfloat16)
    yb = y.astype(jnp.bfloat16)
    out_bf = jax.block_until_ready(dice_loss(xb, yb, image=False))
    ref_bf = jax.block_until_ready(_dice_loss_ref(xb, yb, image=False))
    assert jnp.allclose(out_bf, ref_bf, atol=2e-2), (out_bf, ref_bf)

    # Exercise the multi-step accumulator + partial-tile masking path at a
    # small shape by shrinking the per-step tile.
    x2 = jax.random.normal(kx, (2, 3, 33, 47), dtype=jnp.float32)
    y2 = (jax.random.uniform(ky, (2, 3, 33, 47)) > 0.5).astype(jnp.float32)
    out2 = jax.block_until_ready(dice_loss(x2, y2, image=True,
                                           max_rows_per_step=16))
    ref2 = jax.block_until_ready(_dice_loss_ref(x2, y2, image=True))
    assert jnp.allclose(out2, ref2, atol=1e-4), (out2, ref2)

    print("KERNEL_OK")
</pallas_src>

<mosaic_0001>
module attributes {stable_mosaic.version = 11 : i64} {
  func.func @_dice_sums_kernel(%arg0: i32, %arg1: i32, %arg2: memref<1x8x128xf32, #tpu.memory_space<vmem>>, %arg3: memref<1x8x128xf32, #tpu.memory_space<vmem>>, %arg4: memref<1x8x128xf32, #tpu.memory_space<vmem>>, %arg5: memref<1x8x128xf32, #tpu.memory_space<vmem>>) attributes {dimension_semantics = [#tpu.dimension_semantics<parallel>, #tpu.dimension_semantics<arbitrary>], iteration_bounds = array<i64: 2, 1>, scalar_prefetch = 0 : i64, scratch_operands = 0 : i64, tpu.core_type = #tpu.core_type<tc>, window_params = [{transform_indices = @transform_0, window_bounds = array<i64: 1, 8, 128>}, {transform_indices = @transform_1, window_bounds = array<i64: 1, 8, 128>}, {transform_indices = @transform_2, window_bounds = array<i64: 1, 8, 128>}, {transform_indices = @transform_3, window_bounds = array<i64: 1, 8, 128>}]} {
    %c0_i32 = arith.constant 0 : i32
    %0 = arith.cmpi eq, %arg1, %c0_i32 : i32
    %1 = arith.extui %0 : i1 to i32
    %c0_i32_0 = arith.constant 0 : i32
    %2 = arith.cmpi ne, %1, %c0_i32_0 : i32
    scf.if %2 {
      %cst_20 = arith.constant 0.000000e+00 : f32
      %26 = vector.broadcast %cst_20 : f32 to vector<1x8x128xf32>
      %c0_21 = arith.constant 0 : index
      %c0_22 = arith.constant 0 : index
      %c0_23 = arith.constant 0 : index
      %27 = vector.load %arg4[%c0_21, %c0_22, %c0_23] : memref<1x8x128xf32, #tpu.memory_space<vmem>>, vector<1x8x128xf32>
      tpu.vector_store %arg4[%c0_21, %c0_22, %c0_23], %26 {strides = array<i32>} : memref<1x8x128xf32, #tpu.memory_space<vmem>>, vector<1x8x128xf32>,
      %cst_24 = arith.constant 0.000000e+00 : f32
      %28 = vector.broadcast %cst_24 : f32 to vector<1x8x128xf32>
      %c0_25 = arith.constant 0 : index
      %c0_26 = arith.constant 0 : index
      %c0_27 = arith.constant 0 : index
      %29 = vector.load %arg5[%c0_25, %c0_26, %c0_27] : memref<1x8x128xf32, #tpu.memory_space<vmem>>, vector<1x8x128xf32>
      tpu.vector_store %arg5[%c0_25, %c0_26, %c0_27], %28 {strides = array<i32>} : memref<1x8x128xf32, #tpu.memory_space<vmem>>, vector<1x8x128xf32>,
    } else {
    }
    %c0 = arith.constant 0 : index
    %c0_1 = arith.constant 0 : index
    %c0_2 = arith.constant 0 : index
    %3 = vector.load %arg2[%c0, %c0_1, %c0_2] : memref<1x8x128xf32, #tpu.memory_space<vmem>>, vector<1x8x128xf32>
    %4 = vector.shape_cast %3 : vector<1x8x128xf32> to vector<8x128xf32>
    %c0_3 = arith.constant 0 : index
    %c0_4 = arith.constant 0 : index
    %c0_5 = arith.constant 0 : index
    %5 = vector.load %arg3[%c0_3, %c0_4, %c0_5] : memref<1x8x128xf32, #tpu.memory_space<vmem>>, vector<1x8x128xf32>
    %6 = vector.shape_cast %5 : vector<1x8x128xf32> to vector<8x128xf32>
    %7 = arith.negf %4 : vector<8x128xf32>
    %8 = math.exp %7 : vector<8x128xf32>
    %cst = arith.constant 1.000000e+00 : f32
    %9 = vector.broadcast %cst : f32 to vector<8x128xf32>
    %10 = arith.addf %9, %8 : vector<8x128xf32>
    %11 = arith.divf %9, %10 : vector<8x128xf32>
    %12 = arith.mulf %11, %6 : vector<8x128xf32>
    %13 = arith.addf %11, %6 : vector<8x128xf32>
    %14 = vector.shape_cast %12 : vector<8x128xf32> to vector<1x8x128xf32>
    %cst_6 = arith.constant dense<0.000000e+00> : vector<8x128xf32>
    %15 = vector.multi_reduction <add>, %14, %cst_6 [0] : vector<1x8x128xf32> to vector<8x128xf32>
    %16 = vector.shape_cast %13 : vector<8x128xf32> to vector<1x8x128xf32>
    %cst_7 = arith.constant dense<0.000000e+00> : vector<8x128xf32>
    %17 = vector.multi_reduction <add>, %16, %cst_7 [0] : vector<1x8x128xf32> to vector<8x128xf32>
    %c0_8 = arith.constant 0 : index
    %c0_9 = arith.constant 0 : index
    %c0_10 = arith.constant 0 : index
    %18 = vector.load %arg4[%c0_8, %c0_9, %c0_10] : memref<1x8x128xf32, #tpu.memory_space<vmem>>, vector<1x8x128xf32>
    %19 = vector.shape_cast %15 : vector<8x128xf32> to vector<1x8x128xf32>
    %20 = arith.addf %18, %19 : vector<1x8x128xf32>
    %c0_11 = arith.constant 0 : index
    %c0_12 = arith.constant 0 : index
    %c0_13 = arith.constant 0 : index
    %21 = vector.load %arg4[%c0_11, %c0_12, %c0_13] : memref<1x8x128xf32, #tpu.memory_space<vmem>>, vector<1x8x128xf32>
    tpu.vector_store %arg4[%c0_11, %c0_12, %c0_13], %20 {strides = array<i32>} : memref<1x8x128xf32, #tpu.memory_space<vmem>>, vector<1x8x128xf32>,
    %c0_14 = arith.constant 0 : index
    %c0_15 = arith.constant 0 : index
    %c0_16 = arith.constant 0 : index
    %22 = vector.load %arg5[%c0_14, %c0_15, %c0_16] : memref<1x8x128xf32, #tpu.memory_space<vmem>>, vector<1x8x128xf32>
    %23 = vector.shape_cast %17 : vector<8x128xf32> to vector<1x8x128xf32>
    %24 = arith.addf %22, %23 : vector<1x8x128xf32>
    %c0_17 = arith.constant 0 : index
    %c0_18 = arith.constant 0 : index
    %c0_19 = arith.constant 0 : index
    %25 = vector.load %arg5[%c0_17, %c0_18, %c0_19] : memref<1x8x128xf32, #tpu.memory_space<vmem>>, vector<1x8x128xf32>
    tpu.vector_store %arg5[%c0_17, %c0_18, %c0_19], %24 {strides = array<i32>} : memref<1x8x128xf32, #tpu.memory_space<vmem>>, vector<1x8x128xf32>,
    return
  }
  func.func @transform_0(%arg0: i32, %arg1: i32) -> (i32, i32, i32) {
    %c0_i32 = arith.constant 0 : i32
    %c0_i32_0 = arith.constant 0 : i32
    return %arg0, %arg1, %c0_i32 : i32, i32, i32
  }
  func.func @transform_1(%arg0: i32, %arg1: i32) -> (i32, i32, i32) {
    %c0_i32 = arith.constant 0 : i32
    %c0_i32_0 = arith.constant 0 : i32
    return %arg0, %arg1, %c0_i32 : i32, i32, i32
  }
  func.func @transform_2(%arg0: i32, %arg1: i32) -> (i32, i32, i32) {
    %c0_i32 = arith.constant 0 : i32
    %c0_i32_0 = arith.constant 0 : i32
    %c0_i32_1 = arith.constant 0 : i32
    return %arg0, %c0_i32, %c0_i32_0 : i32, i32, i32
  }
  func.func @transform_3(%arg0: i32, %arg1: i32) -> (i32, i32, i32) {
    %c0_i32 = arith.constant 0 : i32
    %c0_i32_0 = arith.constant 0 : i32
    %c0_i32_1 = arith.constant 0 : i32
    return %arg0, %c0_i32, %c0_i32_0 : i32, i32, i32
  }
}

</mosaic_0001>

<llo_original>
// kernel: dice_loss.1
$region0: #{dice_loss.1}
  #allocation0 [shape = 'u32[]', space=smem, size = 0x4, offset = 0x4, fixed_abs, tag = 'smem constant byte address 0x4 - core index']
  #allocation1 [shape = 'u32[144,128]{1,0:T(1,128)}', space=vmem, size = 0x12000, scoped, tag = 'internal scratch']
  %s0 = inlined_call_operand.vmem [shape: f32[2,8,128], index: 0, kind: input, shape index: {}]
  %s1 = inlined_call_operand.vmem [shape: f32[2,8,128], index: 1, kind: input, shape index: {}]
  %s2 = inlined_call_operand.vmem [shape: f32[2,8,128], index: 2, kind: output, shape index: {0}]
  %s3 = inlined_call_operand.vmem [shape: f32[2,8,128], index: 3, kind: output, shape index: {1}]
  %4 = xla_tuple %s2, %s3
  %s5 = sld [smem:[#allocation0]]
  $region53: #{dice_loss.1} parent=0
    _
  %s7 = ssub.s32 1, %s5
  %s8 = scalar_select 0, %s7, %s5
  loop: start=0, step=1, limit=4
  $region2: #{dice_loss.1} parent=0 // loop_pre_header
    _
  $region3: #{dice_loss.1} parent=0 // loop_header
    %s10 = sphi 0, %s14
    %p11 = scmp.ge.s32.totalorder %s10, 4
    %s17 = sphi 0, %s29
    %s18 = sphi 0, %s25
    %s19 = sphi 0, %s17
    %s20 = sphi 0, %s18
    %s21 = sphi 0, %s19
    %s22 = sphi 0, %s20
    %s34 = sphi 0, %s36
    %s37 = sphi 0, %s34
    %s38 = sphi 0, %s37
    %s54 = sphi 0, %s38
    %s62 = sphi 0, %s64
    %s65 = sphi 0, %s62
    %s66 = sphi 0, %s65
    %s82 = sphi 0, %s66
    %s88 = sphi 0, %s90
    %s91 = sphi 0, %s88
    %s92 = sphi 0, %s91
    %s108 = sphi 0, %s92
    %s114 = sphi 0, %s116
    %s117 = sphi 0, %s114
    %s118 = sphi 0, %s117
    %s134 = sphi 0, %s118
  $region4: #{dice_loss.1} parent=0 // loop_header_branch
    %13 = sbr.rel (%p11) target = $region8
  $region5: #{dice_loss.1} parent=0 // loop_body
    %s15 = ssub.s32 %s10, 1
    %s16 = ssub.s32 %s10, 2
    %s23 = sadd.s32 1, %s18
    %p24 = scmp.ge.s32.totalorder %s23, 1
    %s25 = scalar_select %p24, 0, %s23
    %s26 = sadd.s32 1, %s17
    %s27 = scalar_select %p24, %s26, %s17
    %p28 = scmp.ge.s32.totalorder %s27, 2
    %s29 = scalar_select %p28, 0, %s27
    %s30 = ssub.s32 %s17, %s29
    %s31 = ssub.s32 %s18, %s25
    %s32 = sor.u32 %s30, %s31
    %p33 = scmp.eq.s32.totalorder %s32, 0
    %s35 = sadd.s32 %s34, 1
    %s36 = scalar_select %p33, %s34, %s35
    %p39 = pneg %p33
    %p40 = scmp.eq.s32.totalorder %s10, 1
    %p41 = por %p39, %p40
    %p42 = scmp.ne.s32.totalorder %s34, %s37
    %p43 = scmp.eq.s32.totalorder %s10, 0
    %p44 = por %p42, %p43
    %p45 = scmp.ne.s32.totalorder %s34, %s37
    %p46 = scmp.eq.s32.totalorder %s15, 1
    %p47 = por %p45, %p46
    %p48 = scmp.ne.s32.totalorder %s37, %s38
    %p49 = scmp.eq.s32.totalorder %s15, 0
    %p50 = por %p48, %p49
    %p51 = scmp.ne.s32.totalorder %s37, %s38
    %p52 = scmp.eq.s32.totalorder %s16, 1
    %p53 = por %p51, %p52
    %p55 = scmp.ne.s32.totalorder %s38, %s54
    %p56 = scmp.eq.s32.totalorder %s16, 0
    %p57 = por %p55, %p56
    %s58 = ssub.s32 %s17, %s29
    %s59 = ssub.s32 %s18, %s25
    %s60 = sor.u32 %s58, %s59
    %p61 = scmp.eq.s32.totalorder %s60, 0
    %s63 = sadd.s32 %s62, 1
    %s64 = scalar_select %p61, %s62, %s63
    %p67 = pneg %p61
    %p68 = scmp.eq.s32.totalorder %s10, 1
    %p69 = por %p67, %p68
    %p70 = scmp.ne.s32.totalorder %s62, %s65
    %p71 = scmp.eq.s32.totalorder %s10, 0
    %p72 = por %p70, %p71
    %p73 = scmp.ne.s32.totalorder %s62, %s65
    %p74 = scmp.eq.s32.totalorder %s15, 1
    %p75 = por %p73, %p74
    %p76 = scmp.ne.s32.totalorder %s65, %s66
    %p77 = scmp.eq.s32.totalorder %s15, 0
    %p78 = por %p76, %p77
    %p79 = scmp.ne.s32.totalorder %s65, %s66
    %p80 = scmp.eq.s32.totalorder %s16, 1
    %p81 = por %p79, %p80
    %p83 = scmp.ne.s32.totalorder %s66, %s82
    %p84 = scmp.eq.s32.totalorder %s16, 0
    %p85 = por %p83, %p84
    %s86 = ssub.s32 %s17, %s29
    %p87 = scmp.eq.s32.totalorder %s86, 0
    %s89 = sadd.s32 %s88, 1
    %s90 = scalar_select %p87, %s88, %s89
    %p93 = pneg %p87
    %p94 = scmp.eq.s32.totalorder %s10, 1
    %p95 = por %p93, %p94
    %p96 = scmp.ne.s32.totalorder %s88, %s91
    %p97 = scmp.eq.s32.totalorder %s10, 0
    %p98 = por %p96, %p97
    %p99 = scmp.ne.s32.totalorder %s88, %s91
    %p100 = scmp.eq.s32.totalorder %s15, 1
    %p101 = por %p99, %p100
    %p102 = scmp.ne.s32.totalorder %s91, %s92
    %p103 = scmp.eq.s32.totalorder %s15, 0
    %p104 = por %p102, %p103
    %p105 = scmp.ne.s32.totalorder %s91, %s92
    %p106 = scmp.eq.s32.totalorder %s16, 1
    %p107 = por %p105, %p106
    %p109 = scmp.ne.s32.totalorder %s92, %s108
    %p110 = scmp.eq.s32.totalorder %s16, 0
    %p111 = por %p109, %p110
    %s112 = ssub.s32 %s17, %s29
    %p113 = scmp.eq.s32.totalorder %s112, 0
    %s115 = sadd.s32 %s114, 1
    %s116 = scalar_select %p113, %s114, %s115
    %p119 = pneg %p113
    %p120 = scmp.eq.s32.totalorder %s10, 1
    %p121 = por %p119, %p120
    %p122 = scmp.ne.s32.totalorder %s114, %s117
    %p123 = scmp.eq.s32.totalorder %s10, 0
    %p124 = por %p122, %p123
    %p125 = scmp.ne.s32.totalorder %s114, %s117
    %p126 = scmp.eq.s32.totalorder %s15, 1
    %p127 = por %p125, %p126
    %p128 = scmp.ne.s32.totalorder %s117, %s118
    %p129 = scmp.eq.s32.totalorder %s15, 0
    %p130 = por %p128, %p129
    %p131 = scmp.ne.s32.totalorder %s117, %s118
    %p132 = scmp.eq.s32.totalorder %s16, 1
    %p133 = por %p131, %p132
    %p135 = scmp.ne.s32.totalorder %s118, %s134
    %p136 = scmp.eq.s32.totalorder %s16, 0
    %p137 = por %p135, %p136
    %p138 = scmp.le.s32.totalorder 1, %s10
    %p139 = scmp.lt.s32.totalorder %s10, 3
    %p140 = pnand %p138, %p139
    %p141 = pneg %p140
    // Predicated region
    $region9: #{dice_loss.1} parent=5 // pred_check
      _
    $region10: #{dice_loss.1} parent=5 // pred_check_branch
      %143 = sbr.rel (%p140) target = $region12
    $region11: #{dice_loss.1} parent=5 // pred_region
      %s144 = ssub.s32 %s10, 1
    $region12: #{dice_loss.1} parent=5 // pred_fallthru
      _
    %p145 = scmp.lt.s32.totalorder %s10, 2
    // Predicated region
    $region13: #{dice_loss.1} parent=5 // pred_check
      %p146 = pneg %p145
    $region14: #{dice_loss.1} parent=5 // pred_check_branch
      %148 = sbr.rel (%p146) target = $region16
    $region15: #{dice_loss.1} parent=5 // pred_region
      // Predicated region
      $region17: #{dice_loss.1} parent=15 // pred_check
        %p149 = pneg %p44
      $region18: #{dice_loss.1} parent=15 // pred_check_branch
        %151 = sbr.rel (%p149) target = $region20
      $region19: #{dice_loss.1} parent=15 // pred_region
        %p152 = scmp.lt.s32.totalorder %s17, 1
        %s153 = scalar_select %p152, %s17, 1
        %p154 = scmp.lt.s32.totalorder %s18, 0
        %s155 = scalar_select %p154, %s18, 0
        %s156 = sadd.s32 %s155, %s153
        %s157 = smul.addr %s156, 8
        %s158 = scalar_lea.vmem %s0, %s157
      $region20: #{dice_loss.1} parent=15 // pred_fallthru
        _
      // Predicated region
      $region21: #{dice_loss.1} parent=15 // pred_check
        %p159 = pneg %p72
      $region22: #{dice_loss.1} parent=15 // pred_check_branch
        %161 = sbr.rel (%p159) target = $region24
      $region23: #{dice_loss.1} parent=15 // pred_region
        %p162 = scmp.lt.s32.totalorder %s17, 1
        %s163 = scalar_select %p162, %s17, 1
        %p164 = scmp.lt.s32.totalorder %s18, 0
        %s165 = scalar_select %p164, %s18, 0
        %s166 = sadd.s32 %s165, %s163
        %s167 = smul.addr %s166, 8
        %s168 = scalar_lea.vmem %s1, %s167
      $region24: #{dice_loss.1} parent=15 // pred_fallthru
        _
    $region16: #{dice_loss.1} parent=5 // pred_fallthru
      _
    %p169 = scmp.le.s32.totalorder 1, %s10
    %p170 = scmp.lt.s32.totalorder %s10, 3
    %p171 = pnand %p169, %p170
    %p172 = pneg %p171
    // Predicated region
    $region25: #{dice_loss.1} parent=5 // pred_check
      _
    $region26: #{dice_loss.1} parent=5 // pred_check_branch
      %174 = sbr.rel (%p171) target = $region28
    $region27: #{dice_loss.1} parent=5 // pred_region
      %s175 = ssub.s32 %s10, 1
      %p176 = scmp.lt.s32.totalorder %s19, 1
      %s177 = scalar_select %p176, %s19, 1
      %p178 = scmp.lt.s32.totalorder %s20, 0
      %s179 = scalar_select %p178, %s20, 0
      %s180 = sadd.s32 %s179, %s177
      %s181 = smul.addr %s180, 8
      %s182 = scalar_lea.vmem %s0, %s181
      %p183 = pneg %p50
      %p184 = pneg %p47
      %p185 = scmp.lt.s32.totalorder %s19, 1
      %s186 = scalar_select %p185, %s19, 1
      %p187 = scmp.lt.s32.totalorder %s20, 0
      %s188 = scalar_select %p187, %s20, 0
      %s189 = sadd.s32 %s188, %s186
      %s190 = smul.addr %s189, 8
      %s191 = scalar_lea.vmem %s1, %s190
      %p192 = pneg %p78
      %p193 = pneg %p75
      %p194 = pneg %p104
      %p195 = pneg %p101
      %p196 = scmp.lt.s32.totalorder %s19, 1
      %s197 = scalar_select %p196, %s19, 1
      %s198 = smul.addr %s197, 8
      %s199 = scalar_lea.vmem %s2, %s198
      %p200 = pneg %p130
      %p201 = pneg %p127
      %p202 = scmp.lt.s32.totalorder %s19, 1
      %s203 = scalar_select %p202, %s19, 1
      %s204 = smul.addr %s203, 8
      %s205 = scalar_lea.vmem %s3, %s204
      %p206 = scmp.lt.s32.totalorder %s19, 1
      %s207 = scalar_select %p206, %s19, 1
      %p208 = scmp.lt.s32.totalorder %s20, 0
      %s209 = scalar_select %p208, %s20, 0
      %s210 = sadd.s32 %s209, %s207
      %s211 = smul.addr %s210, 8
      %s212 = scalar_lea.vmem %s0, %s211
      %p213 = scmp.lt.s32.totalorder %s19, 1
      %s214 = scalar_select %p213, %s19, 1
      %p215 = scmp.lt.s32.totalorder %s20, 0
      %s216 = scalar_select %p215, %s20, 0
      %s217 = sadd.s32 %s216, %s214
      %s218 = smul.addr %s217, 8
      %s219 = scalar_lea.vmem %s1, %s218
      %p220 = scmp.lt.s32.totalorder %s19, 1
      %s221 = scalar_select %p220, %s19, 1
      %s222 = smul.addr %s221, 8
      %s223 = scalar_lea.vmem %s2, %s222
      %p224 = scmp.lt.s32.totalorder %s19, 1
      %s225 = scalar_select %p224, %s19, 1
      %s226 = smul.addr %s225, 8
      %s227 = scalar_lea.vmem %s3, %s226
      %p228 = scmp.eq.s32.totalorder %s20, 0
      // Predicated region
      $region29: #{dice_loss.1} parent=27 // pred_check
        %p229 = pneg %p228
      $region30: #{dice_loss.1} parent=27 // pred_check_branch
        %231 = sbr.rel (%p229) target = $region32
      $region31: #{dice_loss.1} parent=27 // pred_region
        %232 = vst [vmem:[%s223] sm:$0xff] 0.0
        %233 = vst [vmem:[%s227] sm:$0xff] 0.0
      $region32: #{dice_loss.1} parent=27 // pred_fallthru
        _
      %v234 = vld [vmem:[%s212] sm:$0xff]
      %v235 = vld [vmem:[%s219] sm:$0xff]
      %v236 = vxor.u32 %v234, 2147483648
      %v237 = vmul.f32 %v236, 1.442695
      %v238 = vpow.pop %v237
      %v239 = vadd.f32 %v238, 1.0
      %v240 = vrcp.pop %v239
      %v241 = vmul.f32 1.0, %v240
      %v242 = vmul.f32 %v241, %v235
      %v243 = vadd.f32 %v241, %v235
      %v244 = vadd.f32 %v242, 0.0
      %v245 = vadd.f32 %v243, 0.0
      %v246 = vld [vmem:[%s223] sm:$0xff]
      %v247 = vadd.f32 %v246, %v244
      %248 = vst [vmem:[%s223] sm:$0xff] %v247
      %v249 = vld [vmem:[%s227] sm:$0xff]
      %v250 = vadd.f32 %v249, %v245
      %251 = vst [vmem:[%s227] sm:$0xff] %v250
      %p252 = scmp.lt.s32.totalorder %s19, 1
      %s253 = scalar_select %p252, %s19, 1
      %s254 = smul.addr %s253, 8
      %s255 = scalar_lea.vmem %s2, %s254
      %p256 = scmp.lt.s32.totalorder %s19, 1
      %s257 = scalar_select %p256, %s19, 1
      %s258 = smul.addr %s257, 8
      %s259 = scalar_lea.vmem %s3, %s258
      // Predicated region
      $region33: #{dice_loss.1} parent=27 // pred_check
        %p260 = pneg %p101
      $region34: #{dice_loss.1} parent=27 // pred_check_branch
        %262 = sbr.rel (%p260) target = $region36
      $region35: #{dice_loss.1} parent=27 // pred_region
        _
      $region36: #{dice_loss.1} parent=27 // pred_fallthru
        _
      // Predicated region
      $region37: #{dice_loss.1} parent=27 // pred_check
        %p263 = pneg %p127
      $region38: #{dice_loss.1} parent=27 // pred_check_branch
        %265 = sbr.rel (%p263) target = $region40
      $region39: #{dice_loss.1} parent=27 // pred_region
        _
      $region40: #{dice_loss.1} parent=27 // pred_fallthru
        _
    $region28: #{dice_loss.1} parent=5 // pred_fallthru
      _
    %p266 = scmp.le.s32.totalorder 2, %s10
    // Predicated region
    $region41: #{dice_loss.1} parent=5 // pred_check
      %p267 = pneg %p266
    $region42: #{dice_loss.1} parent=5 // pred_check_branch
      %269 = sbr.rel (%p267) target = $region44
    $region43: #{dice_loss.1} parent=5 // pred_region
      %s270 = ssub.s32 %s10, 2
      // Predicated region
      $region45: #{dice_loss.1} parent=43 // pred_check
        %p271 = pneg %p107
      $region46: #{dice_loss.1} parent=43 // pred_check_branch
        %273 = sbr.rel (%p271) target = $region48
      $region47: #{dice_loss.1} parent=43 // pred_region
        %p274 = scmp.lt.s32.totalorder %s21, 1
        %s275 = scalar_select %p274, %s21, 1
        %s276 = smul.addr %s275, 8
        %s277 = scalar_lea.vmem %s2, %s276
      $region48: #{dice_loss.1} parent=43 // pred_fallthru
        _
      // Predicated region
      $region49: #{dice_loss.1} parent=43 // pred_check
        %p278 = pneg %p133
      $region50: #{dice_loss.1} parent=43 // pred_check_branch
        %280 = sbr.rel (%p278) target = $region52
      $region51: #{dice_loss.1} parent=43 // pred_region
        %p281 = scmp.lt.s32.totalorder %s21, 1
        %s282 = scalar_select %p281, %s21, 1
        %s283 = smul.addr %s282, 8
        %s284 = scalar_lea.vmem %s3, %s283
      $region52: #{dice_loss.1} parent=43 // pred_fallthru
        _
    $region44: #{dice_loss.1} parent=5 // pred_fallthru
      _
  $region6: #{dice_loss.1} parent=0 // loop_footer
    %s14 = sadd.s32 1, %s10
  $region7: #{dice_loss.1} parent=0 // loop_footer_branch
    %9 = sbr.rel target = $region3
  $region8: #{dice_loss.1} parent=0 // loop_exit
    _

</llo_original>
